<compile_context>
chip_gen: v5e
topology: v5e:2x2
jax: 0.10.0
libtpu: 0.0.40
codegen_flags: <defaults>
</compile_context>

<pallas_src>
import math

import jax
import jax.numpy as jnp
from jax.experimental import pallas as pl
from jax.experimental.pallas import tpu as pltpu


def _align_conv_kernel(x_ref, w_ref, b_ref, o_ref):
    # x_ref: [m_blk, G*c_in]   lane-dense packed positions (pipelined)
    # w_ref: [G*c_in, G*c_out] block-diagonal weight (VMEM resident)
    # b_ref: [1,  G*c_out]     tiled bias, f32 (VMEM resident)
    # o_ref: [m_blk, G*c_out]
    acc = jnp.dot(x_ref[...], w_ref[...], preferred_element_type=jnp.float32)
    o_ref[...] = (acc + b_ref[...]).astype(o_ref.dtype)


def _sublane_multiple(dtype) -> int:
    # second-to-last block dim must be a multiple of 8 (f32) / 16 (bf16) / 32 (int8)
    return {4: 8, 2: 16, 1: 32}.get(jnp.dtype(dtype).itemsize, 8)


def _pack_factor(c_in, c_out, m) -> int:
    """Smallest G making G*c_in and G*c_out lane-dense (mult. of 128), if it divides M."""
    g_in = 128 // math.gcd(c_in, 128)
    g_out = 128 // math.gcd(c_out, 128)
    g = g_in * g_out // math.gcd(g_in, g_out)  # lcm
    if m % g == 0:
        return g
    if m % g_in == 0:
        return g_in
    return 1


def align(x, weight=None, bias=None, c_out=None, *, target_block_bytes=2 << 20):
    """Align forward.  x: [B, T, N, c_in]; weight: [c_out, c_in, 1, 1]; bias: [c_out]."""
    B, T, N, c_in = x.shape
    if c_out is None:
        c_out = c_in

    if c_in == c_out:                       # identity branch (no compute)
        return x
    if c_in < c_out:                        # zero-pad branch (pure data movement)
        pad = jnp.zeros((B, T, N, c_out - c_in), x.dtype)
        return jnp.concatenate([x, pad], axis=-1)

    # ---- c_in > c_out: 1x1 conv == per-position channel matmul (Pallas) ----
    M = B * T * N
    itemsize = jnp.dtype(x.dtype).itemsize
    sub = _sublane_multiple(x.dtype)

    # Lane-dense packing: fold G positions per row so channels fill 128 lanes.
    G = _pack_factor(c_in, c_out, M)
    gcin, gcout = G * c_in, G * c_out
    Mp = M // G

    x_packed = x.reshape(Mp, gcin)          # free contiguous view (row-major)

    w_small = weight.reshape(c_out, c_in).T.astype(x.dtype)       # [c_in, c_out]
    if G > 1:
        # block-diagonal weight: group g of the packed row -> group g of the output
        w_big = jnp.kron(jnp.eye(G, dtype=w_small.dtype), w_small)  # [G*c_in, G*c_out]
        b_big = jnp.tile(bias.reshape(1, c_out), (1, G)).astype(jnp.float32)
    else:
        w_big = w_small
        b_big = bias.reshape(1, c_out).astype(jnp.float32)

    # M block: ~target_block_bytes of input per grid step, dtype-aware sublane
    # rounding, and >= 2 grid steps whenever possible (v7x megacore). No host
    # padding: ragged last block is handled by Pallas OOB semantics.
    row_bytes = gcin * itemsize
    m_blk = max(sub, (target_block_bytes // row_bytes) // sub * sub)
    half = (((Mp + 1) // 2 + sub - 1) // sub) * sub
    m_blk = min(m_blk, half)
    if m_blk >= Mp:
        m_blk = Mp                          # full extent (always a legal block dim)
    grid_m = pl.cdiv(Mp, m_blk)

    # VMEM budget: double-buffered in/out tiles + resident weight/bias (+ headroom).
    need_bytes = (2 * m_blk * (gcin + gcout) * itemsize
                  + gcin * gcout * itemsize + gcout * 4)
    vmem_limit = int(min(48 << 20, max(16 << 20, 2 * need_bytes)))

    cost = pl.CostEstimate(
        flops=2 * M * c_in * c_out,
        transcendentals=0,
        bytes_accessed=(M * (c_in + c_out)) * itemsize
                       + gcin * gcout * itemsize + gcout * 4,
    )

    out_packed = pl.pallas_call(
        _align_conv_kernel,
        out_shape=jax.ShapeDtypeStruct((Mp, gcout), x.dtype),
        grid_spec=pltpu.PrefetchScalarGridSpec(
            num_scalar_prefetch=0,
            grid=(grid_m,),
            in_specs=[
                pl.BlockSpec((m_blk, gcin), lambda i: (i, 0)),    # x rows (pipelined)
                pl.BlockSpec((gcin, gcout), lambda i: (0, 0)),    # weight (resident)
                pl.BlockSpec((1, gcout), lambda i: (0, 0)),       # bias   (resident)
            ],
            out_specs=pl.BlockSpec((m_blk, gcout), lambda i: (i, 0)),
        ),
        compiler_params=pltpu.CompilerParams(
            dimension_semantics=("parallel",),
            vmem_limit_bytes=vmem_limit,
        ),
        cost_estimate=cost,
    )(x_packed, w_big, b_big)

    # Packed output [Mp, G*c_out] is exactly [B, T, N, c_out] in row-major order.
    return out_packed.reshape(B, T, N, c_out)


def reference_align(x, weight=None, bias=None, c_out=None):
    """Pure-JAX reference mirroring the PyTorch Align forward."""
    B, T, N, c_in = x.shape
    if c_out is None:
        c_out = c_in
    if c_in == c_out:
        return x
    if c_in < c_out:
        pad = jnp.zeros((B, T, N, c_out - c_in), x.dtype)
        return jnp.concatenate([x, pad], axis=-1)
    w = weight.reshape(c_out, c_in)             # conv 1x1 kernel
    return jnp.einsum('btnc,oc->btno', x, w) + bias


if __name__ == "__main__":
    key = jax.random.PRNGKey(0)
    k0, k1, k2 = jax.random.split(key, 3)

    # --- c_in > c_out branch (the compute branch -> Pallas kernel) ----------
    B, T, N, c_in, c_out = 2, 8, 16, 32, 16
    x = jax.random.normal(k0, (B, T, N, c_in), jnp.float32)
    weight = 0.1 * jax.random.normal(k1, (c_out, c_in, 1, 1), jnp.float32)
    bias = 0.1 * jax.random.normal(k2, (c_out,), jnp.float32)

    out = jax.block_until_ready(align(x, weight, bias, c_out))
    assert out.shape == (B, T, N, c_out), out.shape
    ref = reference_align(x, weight, bias, c_out)
    err = float(jnp.max(jnp.abs(out - ref)))
    assert jnp.allclose(out, ref, atol=1e-3, rtol=1e-3), err

    # --- ragged M (exercises the no-pad / OOB last block path) ---------------
    Br, Tr, Nr = 1, 5, 16                         # M = 80 -> Mp = 10, m_blk = 8, grid = 2
    xr = jax.random.normal(k0, (Br, Tr, Nr, c_in), jnp.float32)
    outr = jax.block_until_ready(align(xr, weight, bias, c_out))
    refr = reference_align(xr, weight, bias, c_out)
    errr = float(jnp.max(jnp.abs(outr - refr)))
    assert jnp.allclose(outr, refr, atol=1e-3, rtol=1e-3), errr

    # --- c_in == c_out branch (identity) -------------------------------------
    same = align(x, c_out=c_in)
    assert same.shape == x.shape and bool(jnp.all(same == x))

    # --- c_in < c_out branch (zero-pad) --------------------------------------
    padded = jax.block_until_ready(align(x, c_out=c_in + 8))
    assert padded.shape == (B, T, N, c_in + 8)
    assert bool(jnp.all(padded[..., :c_in] == x))
    assert bool(jnp.all(padded[..., c_in:] == 0.0))

    print("KERNEL_OK")
</pallas_src>

<mosaic_0001>
module attributes {stable_mosaic.version = 11 : i64} {
  func.func @_align_conv_kernel(%arg0: i32, %arg1: memref<16x256xf32, #tpu.memory_space<vmem>>, %arg2: memref<256x128xf32, #tpu.memory_space<vmem>>, %arg3: memref<1x128xf32, #tpu.memory_space<vmem>>, %arg4: memref<16x128xf32, #tpu.memory_space<vmem>>) attributes {dimension_semantics = [#tpu.dimension_semantics<parallel>], iteration_bounds = array<i64: 2>, scalar_prefetch = 0 : i64, scratch_operands = 0 : i64, tpu.core_type = #tpu.core_type<tc>, window_params = [{transform_indices = @transform_0, window_bounds = array<i64: 16, 256>}, {pipeline_mode = #tpu.pipeline_mode<synchronous>, transform_indices = @transform_1, window_bounds = array<i64: 256, 128>}, {pipeline_mode = #tpu.pipeline_mode<synchronous>, transform_indices = @transform_2, window_bounds = array<i64: 1, 128>}, {transform_indices = @transform_3, window_bounds = array<i64: 16, 128>}]} {
    %c0 = arith.constant 0 : index
    %c0_0 = arith.constant 0 : index
    %0 = vector.load %arg1[%c0, %c0_0] : memref<16x256xf32, #tpu.memory_space<vmem>>, vector<16x256xf32>
    %c0_1 = arith.constant 0 : index
    %c0_2 = arith.constant 0 : index
    %1 = vector.load %arg2[%c0_1, %c0_2] : memref<256x128xf32, #tpu.memory_space<vmem>>, vector<256x128xf32>
    %cst = arith.constant dense<0.000000e+00> : vector<16x128xf32>
    %2 = tpu.matmul %0, %1, %cst {dimension_numbers = #tpu.dot_dimension_numbers<[1], [0], [0], [1], [0, 0, 1, 1], [], []>} : vector<16x256xf32>, vector<256x128xf32>, vector<16x128xf32> -> vector<16x128xf32>
    %c0_3 = arith.constant 0 : index
    %c0_4 = arith.constant 0 : index
    %3 = vector.load %arg3[%c0_3, %c0_4] : memref<1x128xf32, #tpu.memory_space<vmem>>, vector<1x128xf32>
    %4 = vector.broadcast %3 : vector<1x128xf32> to vector<16x128xf32>
    %5 = arith.addf %2, %4 : vector<16x128xf32>
    %c0_5 = arith.constant 0 : index
    %c0_6 = arith.constant 0 : index
    %6 = vector.load %arg4[%c0_5, %c0_6] : memref<16x128xf32, #tpu.memory_space<vmem>>, vector<16x128xf32>
    tpu.vector_store %arg4[%c0_5, %c0_6], %5 {strides = array<i32>} : memref<16x128xf32, #tpu.memory_space<vmem>>, vector<16x128xf32>,
    return
  }
  func.func @transform_0(%arg0: i32) -> (i32, i32) {
    %c0_i32 = arith.constant 0 : i32
    %c0_i32_0 = arith.constant 0 : i32
    return %arg0, %c0_i32 : i32, i32
  }
  func.func @transform_1(%arg0: i32) -> (i32, i32) {
    %c0_i32 = arith.constant 0 : i32
    %c0_i32_0 = arith.constant 0 : i32
    %c0_i32_1 = arith.constant 0 : i32
    return %c0_i32, %c0_i32_0 : i32, i32
  }
  func.func @transform_2(%arg0: i32) -> (i32, i32) {
    %c0_i32 = arith.constant 0 : i32
    %c0_i32_0 = arith.constant 0 : i32
    %c0_i32_1 = arith.constant 0 : i32
    return %c0_i32, %c0_i32_0 : i32, i32
  }
  func.func @transform_3(%arg0: i32) -> (i32, i32) {
    %c0_i32 = arith.constant 0 : i32
    %c0_i32_0 = arith.constant 0 : i32
    return %arg0, %c0_i32 : i32, i32
  }
}

</mosaic_0001>

<llo_original>
// kernel: tpu_custom_call.1
$region0: #{tpu_custom_call.1}
  #allocation0 [shape = 'u32[]', space=smem, size = 0x4, offset = 0x4, fixed_abs, tag = 'smem constant byte address 0x4 - core index']
  #allocation1 [shape = 'u32[72,128]{1,0:T(1,128)}', space=vmem, size = 0x9000, scoped, tag = 'internal scratch']
  %s0 = inlined_call_operand.hbm [shape: f32[32,256], index: 0, kind: input, shape index: {}]
  %s1 = inlined_call_operand.hbm [shape: f32[256,128], index: 1, kind: input, shape index: {}]
  %s2 = inlined_call_operand.vmem [shape: f32[1,128], index: 2, kind: input, shape index: {}]
  %s3 = inlined_call_operand.hbm [shape: f32[32,128], index: 3, kind: output, shape index: {}]
  %s4 = sld [smem:[#allocation0]]
  $region53: #{tpu_custom_call.1} parent=0
    _
  %s6 = ssub.s32 1, %s4
  %s7 = scalar_select 0, %s6, %s4
  $region1: #{tpu_custom_call.1} parent=0
    #allocation2 [shape = 'u8[32768]{0}', space=vmem, size = 0x8000, scoped, tag = 'input window, operand 0']
    #allocation3 [shape = 's32[2]{0}', space=sflag, size = 0x8, scoped, tag = 'scoped memory for tpu_custom_call.1']
    #allocation4 [shape = 's32[2]{0}', space=sflag, size = 0x8, scoped, tag = 'scoped memory for tpu_custom_call.1']
    #allocation5 [shape = 'u8[131072]{0}', space=vmem, size = 0x20000, scoped, tag = 'input window, operand 1, single buffered']
    #allocation6 [shape = 's32[1]{0}', space=sflag, size = 0x4, scoped, tag = 'scoped memory for tpu_custom_call.1']
    #allocation7 [shape = 'u8[16384]{0}', space=vmem, size = 0x4000, scoped, tag = 'output window, operand 0']
    %8 = vsyncpa [#allocation3], 0
    %s9 = scalar_lea.sflag [#allocation3], 1
    %10 = vsyncpa %s9, 0
    %11 = vsyncpa [#allocation6], 0
    %12 = vsyncpa [#allocation4], 0
    %s13 = scalar_lea.sflag [#allocation4], 1
    %14 = vsyncpa %s13, 0
    loop: start=0, step=1, limit=4
    $region2: #{tpu_custom_call.1} parent=1 // loop_pre_header
      _
    $region3: #{tpu_custom_call.1} parent=1 // loop_header
      %s16 = sphi 0, %s20
      %p17 = scmp.ge.s32.totalorder %s16, 4
      %s26 = sphi 0, %s28
      %s29 = sphi 0, %s26
      %s30 = sphi 0, %s29
      %s46 = sphi 0, %s30
      %s50 = sphi 0, %s50
      %s52 = sphi 0, %s50
      %s53 = sphi 0, %s52
      %s67 = sphi 0, %s53
      %s71 = sphi 0, %s71
      %s73 = sphi 0, %s71
      %s74 = sphi 0, %s73
      %s88 = sphi 0, %s74
      %s94 = sphi 0, %s96
      %s97 = sphi 0, %s94
      %s98 = sphi 0, %s97
      %s114 = sphi 0, %s98
    $region4: #{tpu_custom_call.1} parent=1 // loop_header_branch
      %19 = sbr.rel (%p17) target = $region8
    $region5: #{tpu_custom_call.1} parent=1 // loop_body
      %s21 = ssub.s32 %s16, 1
      %s22 = ssub.s32 %s16, 2
      %s23 = sadd.s32 %s16, 1
      %s24 = ssub.s32 %s16, %s23
      %p25 = scmp.eq.s32.totalorder %s24, 0
      %s27 = sadd.s32 %s26, 1
      %s28 = scalar_select %p25, %s26, %s27
      %p31 = pneg %p25
      %p32 = scmp.eq.s32.totalorder %s16, 1
      %p33 = por %p31, %p32
      %p34 = scmp.ne.s32.totalorder %s26, %s29
      %p35 = scmp.eq.s32.totalorder %s16, 0
      %p36 = por %p34, %p35
      %p37 = scmp.ne.s32.totalorder %s26, %s29
      %p38 = scmp.eq.s32.totalorder %s21, 1
      %p39 = por %p37, %p38
      %p40 = scmp.ne.s32.totalorder %s29, %s30
      %p41 = scmp.eq.s32.totalorder %s21, 0
      %p42 = por %p40, %p41
      %p43 = scmp.ne.s32.totalorder %s29, %s30
      %p44 = scmp.eq.s32.totalorder %s22, 1
      %p45 = por %p43, %p44
      %p47 = scmp.ne.s32.totalorder %s30, %s46
      %p48 = scmp.eq.s32.totalorder %s22, 0
      %p49 = por %p47, %p48
      %s51 = sadd.s32 %s50, 1
      %p54 = scmp.eq.s32.totalorder %s16, 1
      %p55 = scmp.ne.s32.totalorder %s50, %s52
      %p56 = scmp.eq.s32.totalorder %s16, 0
      %p57 = por %p55, %p56
      %p58 = scmp.ne.s32.totalorder %s50, %s52
      %p59 = scmp.eq.s32.totalorder %s21, 1
      %p60 = por %p58, %p59
      %p61 = scmp.ne.s32.totalorder %s52, %s53
      %p62 = scmp.eq.s32.totalorder %s21, 0
      %p63 = por %p61, %p62
      %p64 = scmp.ne.s32.totalorder %s52, %s53
      %p65 = scmp.eq.s32.totalorder %s22, 1
      %p66 = por %p64, %p65
      %p68 = scmp.ne.s32.totalorder %s53, %s67
      %p69 = scmp.eq.s32.totalorder %s22, 0
      %p70 = por %p68, %p69
      %s72 = sadd.s32 %s71, 1
      %p75 = scmp.eq.s32.totalorder %s16, 1
      %p76 = scmp.ne.s32.totalorder %s71, %s73
      %p77 = scmp.eq.s32.totalorder %s16, 0
      %p78 = por %p76, %p77
      %p79 = scmp.ne.s32.totalorder %s71, %s73
      %p80 = scmp.eq.s32.totalorder %s21, 1
      %p81 = por %p79, %p80
      %p82 = scmp.ne.s32.totalorder %s73, %s74
      %p83 = scmp.eq.s32.totalorder %s21, 0
      %p84 = por %p82, %p83
      %p85 = scmp.ne.s32.totalorder %s73, %s74
      %p86 = scmp.eq.s32.totalorder %s22, 1
      %p87 = por %p85, %p86
      %p89 = scmp.ne.s32.totalorder %s74, %s88
      %p90 = scmp.eq.s32.totalorder %s22, 0
      %p91 = por %p89, %p90
      %s92 = ssub.s32 %s16, %s23
      %p93 = scmp.eq.s32.totalorder %s92, 0
      %s95 = sadd.s32 %s94, 1
      %s96 = scalar_select %p93, %s94, %s95
      %p99 = pneg %p93
      %p100 = scmp.eq.s32.totalorder %s16, 1
      %p101 = por %p99, %p100
      %p102 = scmp.ne.s32.totalorder %s94, %s97
      %p103 = scmp.eq.s32.totalorder %s16, 0
      %p104 = por %p102, %p103
      %p105 = scmp.ne.s32.totalorder %s94, %s97
      %p106 = scmp.eq.s32.totalorder %s21, 1
      %p107 = por %p105, %p106
      %p108 = scmp.ne.s32.totalorder %s97, %s98
      %p109 = scmp.eq.s32.totalorder %s21, 0
      %p110 = por %p108, %p109
      %p111 = scmp.ne.s32.totalorder %s97, %s98
      %p112 = scmp.eq.s32.totalorder %s22, 1
      %p113 = por %p111, %p112
      %p115 = scmp.ne.s32.totalorder %s98, %s114
      %p116 = scmp.eq.s32.totalorder %s22, 0
      %p117 = por %p115, %p116
      %p118 = scmp.le.s32.totalorder 1, %s16
      %p119 = scmp.lt.s32.totalorder %s16, 3
      %p120 = pnand %p118, %p119
      %p121 = pneg %p120
      // Predicated region
      $region9: #{tpu_custom_call.1} parent=5 // pred_check
        _
      $region10: #{tpu_custom_call.1} parent=5 // pred_check_branch
        %123 = sbr.rel (%p120) target = $region12
      $region11: #{tpu_custom_call.1} parent=5 // pred_region
        %s124 = ssub.s32 %s16, 1
        // Predicated region
        $region13: #{tpu_custom_call.1} parent=11 // pred_check
          %p125 = pneg %p63
        $region14: #{tpu_custom_call.1} parent=11 // pred_check_branch
          %127 = sbr.rel (%p125) target = $region16
        $region15: #{tpu_custom_call.1} parent=11 // pred_region
          %129 = vsyncadd [#allocation6], 0
          %s130 = sshll.u32 %s1, 4
          %s131 = int_to_ptr.hbm [resolvable:$true] %s130
          %s132 = sshll.u32 [#allocation5], 4
          %s133 = int_to_ptr.vmem [resolvable:$true] %s132
          %138 = dma.hbm_to_vmem [thread:$0]  %s131, 4096, %s133, [#allocation6], 128, 128, 8
        $region16: #{tpu_custom_call.1} parent=11 // pred_fallthru
          _
        // Predicated region
        $region17: #{tpu_custom_call.1} parent=11 // pred_check
          %p139 = pneg %p84
        $region18: #{tpu_custom_call.1} parent=11 // pred_check_branch
          %141 = sbr.rel (%p139) target = $region20
        $region19: #{tpu_custom_call.1} parent=11 // pred_region
          _
        $region20: #{tpu_custom_call.1} parent=11 // pred_fallthru
          _
      $region12: #{tpu_custom_call.1} parent=5 // pred_fallthru
        _
      %p142 = scmp.lt.s32.totalorder %s16, 2
      // Predicated region
      $region21: #{tpu_custom_call.1} parent=5 // pred_check
        %p143 = pneg %p142
      $region22: #{tpu_custom_call.1} parent=5 // pred_check_branch
        %145 = sbr.rel (%p143) target = $region24
      $region23: #{tpu_custom_call.1} parent=5 // pred_region
        // Predicated region
        $region25: #{tpu_custom_call.1} parent=23 // pred_check
          %p146 = pneg %p36
        $region26: #{tpu_custom_call.1} parent=23 // pred_check_branch
          %148 = sbr.rel (%p146) target = $region28
        $region27: #{tpu_custom_call.1} parent=23 // pred_region
          %s149 = sand.u32 %s26, 1
          %s150 = scalar_lea.sflag [#allocation3], %s149
          %s151 = sand.u32 %s26, 1
          %s152 = smul.addr %s151, 32
          %s153 = scalar_lea.vmem [#allocation2], %s152
          %s154 = smul.u32 2, %s16
          %156 = vsyncadd %s150, 0
          %s157 = smul.addr %s154, 2
          %s158 = smul.addr %s157, 8
          %s159 = scalar_lea.hbm %s0, %s158
          %s160 = sshll.u32 %s159, 4
          %s161 = int_to_ptr.hbm [resolvable:$true] %s160
          %s162 = sshll.u32 %s153, 4
          %s163 = int_to_ptr.vmem [resolvable:$true] %s162
          %168 = dma.hbm_to_vmem [thread:$0]  %s161, 512, %s163, %s150, 256, 256, 16
        $region28: #{tpu_custom_call.1} parent=23 // pred_fallthru
          _
      $region24: #{tpu_custom_call.1} parent=5 // pred_fallthru
        _
      %p169 = scmp.le.s32.totalorder 1, %s16
      %p170 = scmp.lt.s32.totalorder %s16, 3
      %p171 = pnand %p169, %p170
      %p172 = pneg %p171
      // Predicated region
      $region29: #{tpu_custom_call.1} parent=5 // pred_check
        _
      $region30: #{tpu_custom_call.1} parent=5 // pred_check_branch
        %174 = sbr.rel (%p171) target = $region32
      $region31: #{tpu_custom_call.1} parent=5 // pred_region
        %s175 = ssub.s32 %s16, 1
        %s176 = sand.u32 %s29, 1
        %s177 = scalar_lea.sflag [#allocation3], %s176
        %s178 = sand.u32 %s29, 1
        %s179 = smul.addr %s178, 32
        %s180 = scalar_lea.vmem [#allocation2], %s179
        // Predicated region
        $region33: #{tpu_custom_call.1} parent=31 // pred_check
          %p181 = pneg %p42
        $region34: #{tpu_custom_call.1} parent=31 // pred_check_branch
          %183 = sbr.rel (%p181) target = $region36
        $region35: #{tpu_custom_call.1} parent=31 // pred_region
          %185 = dma.done %s177, 512
        $region36: #{tpu_custom_call.1} parent=31 // pred_fallthru
          _
        // Predicated region
        $region37: #{tpu_custom_call.1} parent=31 // pred_check
          %p186 = pneg %p63
        $region38: #{tpu_custom_call.1} parent=31 // pred_check_branch
          %188 = sbr.rel (%p186) target = $region40
        $region39: #{tpu_custom_call.1} parent=31 // pred_region
          %190 = dma.done [#allocation6], 4096
        $region40: #{tpu_custom_call.1} parent=31 // pred_fallthru
          _
        %s191 = sand.u32 %s29, 1
        %s192 = scalar_lea.sflag [#allocation3], %s191
        %s193 = sand.u32 %s29, 1
        %s194 = smul.addr %s193, 32
        %s195 = scalar_lea.vmem [#allocation2], %s194
        %p196 = pneg %p42
        %p197 = pneg %p39
        %p198 = pneg %p63
        %p199 = pneg %p60
        %p200 = pneg %p84
        %p201 = pneg %p81
        %p202 = pneg %p110
        %p203 = pneg %p107
        %s204 = sand.u32 %s97, 1
        %s205 = scalar_lea.sflag [#allocation4], %s204
        %s206 = sand.u32 %s97, 1
        %s207 = smul.addr %s206, 16
        %s208 = scalar_lea.vmem [#allocation7], %s207
        %s209 = smul.u32 2, %s21
        %s210 = smul.u32 2, %s21
        %v211 = vld [vmem:[%s180] sm:$0xff]
        %v212 = vld [vmem:[%s180 + $0x8] sm:$0xff]
        %v213 = vld [vmem:[%s180 + $0x10] sm:$0xff]
        %v214 = vld [vmem:[%s180 + $0x18] sm:$0xff]
        %v215 = vld [vmem:[#allocation5] sm:$0xff]
        %v216 = vld [vmem:[#allocation5 + $0x8] sm:$0xff]
        %v217 = vld [vmem:[#allocation5 + $0x10] sm:$0xff]
        %v218 = vld [vmem:[#allocation5 + $0x18] sm:$0xff]
        %v219 = vld [vmem:[#allocation5 + $0x20] sm:$0xff]
        %v220 = vld [vmem:[#allocation5 + $0x28] sm:$0xff]
        %v221 = vld [vmem:[#allocation5 + $0x30] sm:$0xff]
        %v222 = vld [vmem:[#allocation5 + $0x38] sm:$0xff]
        %v223 = vld [vmem:[#allocation5 + $0x40] sm:$0xff]
        %v224 = vld [vmem:[#allocation5 + $0x48] sm:$0xff]
        %v225 = vld [vmem:[#allocation5 + $0x50] sm:$0xff]
        %v226 = vld [vmem:[#allocation5 + $0x58] sm:$0xff]
        %v227 = vld [vmem:[#allocation5 + $0x60] sm:$0xff]
        %v228 = vld [vmem:[#allocation5 + $0x68] sm:$0xff]
        %v229 = vld [vmem:[#allocation5 + $0x70] sm:$0xff]
        %v230 = vld [vmem:[#allocation5 + $0x78] sm:$0xff]
        %v231 = vld [vmem:[#allocation5 + $0x80] sm:$0xff]
        %v232 = vld [vmem:[#allocation5 + $0x88] sm:$0xff]
        %v233 = vld [vmem:[#allocation5 + $0x90] sm:$0xff]
        %v234 = vld [vmem:[#allocation5 + $0x98] sm:$0xff]
        %v235 = vld [vmem:[#allocation5 + $0xa0] sm:$0xff]
        %v236 = vld [vmem:[#allocation5 + $0xa8] sm:$0xff]
        %v237 = vld [vmem:[#allocation5 + $0xb0] sm:$0xff]
        %v238 = vld [vmem:[#allocation5 + $0xb8] sm:$0xff]
        %v239 = vld [vmem:[#allocation5 + $0xc0] sm:$0xff]
        %v240 = vld [vmem:[#allocation5 + $0xc8] sm:$0xff]
        %v241 = vld [vmem:[#allocation5 + $0xd0] sm:$0xff]
        %v242 = vld [vmem:[#allocation5 + $0xd8] sm:$0xff]
        %v243 = vld [vmem:[#allocation5 + $0xe0] sm:$0xff]
        %v244 = vld [vmem:[#allocation5 + $0xe8] sm:$0xff]
        %v245 = vld [vmem:[#allocation5 + $0xf0] sm:$0xff]
        %v246 = vld [vmem:[#allocation5 + $0xf8] sm:$0xff]
        %v247 = vld [vmem:[%s2] sm:$0x1]
        %v249 = vperm.slane %v247, 0
        %251 = vmatpush.msra.mxu0 %v230
        %252 = vmatpush.msra.mxu0 %v229
        %253 = vmatpush.msra.mxu0 %v228
        %254 = vmatpush.msra.mxu0 %v227
        %255 = vmatpush.msra.mxu0 %v226
        %256 = vmatpush.msra.mxu0 %v225
        %257 = vmatpush.msra.mxu0 %v224
        %258 = vmatpush.msra.mxu0 %v223
        %259 = vmatpush.msra.mxu0 %v222
        %260 = vmatpush.msra.mxu0 %v221
        %261 = vmatpush.msra.mxu0 %v220
        %262 = vmatpush.msra.mxu0 %v219
        %263 = vmatpush.msra.mxu0 %v218
        %264 = vmatpush.msra.mxu0 %v217
        %265 = vmatpush.msra.mxu0 %v216
        %266 = vmatpush.msra.mxu0 %v215
        %267 = vmatmul.f32.gmra.mxu0 %v211
        %v268 = vpop.f32.mrf.mxu0
        %v269 = vadd.f32 %v249, %v268
        %270 = vmatmul.f32.gmra.mxu0 %v213
        %v271 = vpop.f32.mrf.mxu0
        %v272 = vadd.f32 %v249, %v271
        %273 = vdwg.mxu0
        %274 = vmatpush.msra.mxu0 %v246
        %275 = vmatpush.msra.mxu0 %v245
        %276 = vmatpush.msra.mxu0 %v244
        %277 = vmatpush.msra.mxu0 %v243
        %278 = vmatpush.msra.mxu0 %v242
        %279 = vmatpush.msra.mxu0 %v241
        %280 = vmatpush.msra.mxu0 %v240
        %281 = vmatpush.msra.mxu0 %v239
        %282 = vmatpush.msra.mxu0 %v238
        %283 = vmatpush.msra.mxu0 %v237
        %284 = vmatpush.msra.mxu0 %v236
        %285 = vmatpush.msra.mxu0 %v235
        %286 = vmatpush.msra.mxu0 %v234
        %287 = vmatpush.msra.mxu0 %v233
        %288 = vmatpush.msra.mxu0 %v232
        %289 = vmatpush.msra.mxu0 %v231
        %290 = vmatmul.f32.gmra.mxu0 %v212
        %v291 = vpop.f32.mrf.mxu0
        %v292 = vadd.f32 %v269, %v291
        %293 = vmatmul.f32.gmra.mxu0 %v214
        %v294 = vpop.f32.mrf.mxu0
        %v295 = vadd.f32 %v272, %v294
        %296 = vdwg.mxu0
        %297 = vst [vmem:[%s208] sm:$0xff] %v292
        %298 = vst [vmem:[%s208 + $0x8] sm:$0xff] %v295
        %s299 = sand.u32 %s97, 1
        %s300 = scalar_lea.sflag [#allocation4], %s299
        %s301 = sand.u32 %s97, 1
        %s302 = smul.addr %s301, 16
        %s303 = scalar_lea.vmem [#allocation7], %s302
        // Predicated region
        $region41: #{tpu_custom_call.1} parent=31 // pred_check
          %p304 = pneg %p107
        $region42: #{tpu_custom_call.1} parent=31 // pred_check_branch
          %306 = sbr.rel (%p304) target = $region44
        $region43: #{tpu_custom_call.1} parent=31 // pred_region
          %s307 = smul.u32 2, %s21
          %309 = vsyncadd %s300, 0
          %s310 = smul.addr %s307, 8
          %s311 = scalar_lea.hbm %s3, %s310
          %s312 = sshll.u32 %s303, 4
          %s313 = int_to_ptr.vmem [resolvable:$true] %s312
          %s314 = sshll.u32 %s311, 4
          %s315 = int_to_ptr.hbm [resolvable:$true] %s314
          %320 = dma.vmem_to_hbm [thread:$0]  %s313, 256, %s315, %s300, 128, 128, 8
        $region44: #{tpu_custom_call.1} parent=31 // pred_fallthru
          _
      $region32: #{tpu_custom_call.1} parent=5 // pred_fallthru
        _
      %p321 = scmp.le.s32.totalorder 2, %s16
      // Predicated region
      $region45: #{tpu_custom_call.1} parent=5 // pred_check
        %p322 = pneg %p321
      $region46: #{tpu_custom_call.1} parent=5 // pred_check_branch
        %324 = sbr.rel (%p322) target = $region48
      $region47: #{tpu_custom_call.1} parent=5 // pred_region
        %s325 = ssub.s32 %s16, 2
        // Predicated region
        $region49: #{tpu_custom_call.1} parent=47 // pred_check
          %p326 = pneg %p113
        $region50: #{tpu_custom_call.1} parent=47 // pred_check_branch
          %328 = sbr.rel (%p326) target = $region52
        $region51: #{tpu_custom_call.1} parent=47 // pred_region
          %s329 = sand.u32 %s98, 1
          %s330 = scalar_lea.sflag [#allocation4], %s329
          %s331 = sand.u32 %s98, 1
          %s332 = smul.addr %s331, 16
          %s333 = scalar_lea.vmem [#allocation7], %s332
          %335 = dma.done %s330, 256
        $region52: #{tpu_custom_call.1} parent=47 // pred_fallthru
          _
      $region48: #{tpu_custom_call.1} parent=5 // pred_fallthru
        _
    $region6: #{tpu_custom_call.1} parent=1 // loop_footer
      %s20 = sadd.s32 1, %s16
    $region7: #{tpu_custom_call.1} parent=1 // loop_footer_branch
      %15 = sbr.rel target = $region3
    $region8: #{tpu_custom_call.1} parent=1 // loop_exit
      _
    %336 = vsyncpa [#allocation3], 1
    %s337 = scalar_lea.sflag [#allocation3], 1
    %338 = vsyncpa %s337, 1
    %339 = vsyncpa [#allocation6], 1
    %340 = vsyncpa [#allocation4], 1
    %s341 = scalar_lea.sflag [#allocation4], 1
    %342 = vsyncpa %s341, 1

</llo_original>
